<compile_context>
chip_gen: v5e
topology: v5e:2x2
jax: 0.10.0
libtpu: 0.0.40
codegen_flags: <defaults>
</compile_context>

<pallas_src>
import functools

import jax
import jax.numpy as jnp
from jax import lax
from jax.experimental import pallas as pl
from jax.experimental.pallas import tpu as pltpu

EMBEDDING_DIMS = 100
NUM_CLASSES = 2
VOCAB_SIZE = 10000

_MAX_BATCH_TILE = 128  # rows per grid step (sublane-aligned, v5e-VMEM safe)


def _word_avg_kernel(ids_ref, proj_ref, bias_ref, out_ref):
    """One grid step handles TB batch rows.

    ids_ref  : SMEM (TB, S) int32   token ids for this batch tile
    proj_ref : VMEM (V+1, C) f32    P = emb_table @ W^T, resident across grid
    bias_ref : VMEM (1, C)   f32
    out_ref  : VMEM (TB, C)  f32
    """
    tb, seq_len = ids_ref.shape
    inv_s = jnp.float32(1.0 / seq_len)
    bias = bias_ref[...]  # (1, C) — hoisted out of the row loop

    def row_body(i, carry):
        # S is static: fully unroll the gather; tree-sum breaks the add
        # dependency chain so the dynamic row loads can overlap.
        rows = [proj_ref[pl.ds(ids_ref[i, s], 1), :] for s in range(seq_len)]
        while len(rows) > 1:
            nxt = [rows[j] + rows[j + 1] for j in range(0, len(rows) - 1, 2)]
            if len(rows) % 2:
                nxt.append(rows[-1])
            rows = nxt
        out_ref[pl.ds(i, 1), :] = rows[0] * inv_s + bias
        return carry

    lax.fori_loop(0, tb, row_body, 0, unroll=min(tb, 8))


@jax.jit
def word_averaging_linear(ids, emb_table, w_t, bias):
    """ids: (B, S) int ; emb_table: (V+1, E) f32 ; w_t: (E, C) f32 ; bias: (C,) f32."""
    B, S = ids.shape
    Vp1, E = emb_table.shape
    C = w_t.shape[1]

    # Fold the Linear weight into the table once (outside the grid).
    # HIGHEST precision keeps full f32 accuracy for the folded table.
    proj = jnp.dot(emb_table, w_t,
                   precision=lax.Precision.HIGHEST,
                   preferred_element_type=jnp.float32)          # (V+1, C)

    # Guard against out-of-range ids (VMEM loads are not bounds-checked).
    ids = jnp.clip(ids.astype(jnp.int32), 0, Vp1 - 1)

    # Batch tiling: TB rows per grid step; pad B up to a multiple of TB.
    tb = B if B <= _MAX_BATCH_TILE else _MAX_BATCH_TILE
    pad = (-B) % tb
    if pad:
        ids = jnp.pad(ids, ((0, pad), (0, 0)))  # pads with token id 0 (valid row)
    Bp = B + pad

    bias2d = bias.reshape(1, C).astype(jnp.float32)

    out = pl.pallas_call(
        _word_avg_kernel,
        out_shape=jax.ShapeDtypeStruct((Bp, C), jnp.float32),
        grid_spec=pltpu.PrefetchScalarGridSpec(
            num_scalar_prefetch=0,
            grid=(Bp // tb,),
            in_specs=[
                pl.BlockSpec((tb, S), lambda b: (b, 0),
                             memory_space=pltpu.SMEM),
                pl.BlockSpec((Vp1, C), lambda b: (0, 0)),   # resident, constant index
                pl.BlockSpec((1, C), lambda b: (0, 0)),
            ],
            out_specs=pl.BlockSpec((tb, C), lambda b: (b, 0)),
        ),
        compiler_params=pltpu.CompilerParams(
            # One independent batch axis -> both TCs on v7x get half the grid.
            dimension_semantics=("parallel",),
            # Headroom over v5e's 16 MiB scoped default (resident table is
            # ~5 MiB lane-padded, double-buffered by the pipeline).
            vmem_limit_bytes=32 * 1024 * 1024,
        ),
        cost_estimate=pl.CostEstimate(
            flops=Bp * S * C + 2 * Bp * C,
            transcendentals=0,
            bytes_accessed=4 * (Vp1 * C + Bp * S + Bp * C),
        ),
    )(ids, proj, bias2d)

    if pad:
        out = out[:B]
    return out


def init_params(key):
    """Deterministic init mirroring WordAveragingLinear.init_weights()."""
    k_emb, k_w = jax.random.split(key)
    bound = jnp.sqrt(6.0 / (VOCAB_SIZE + 1 + EMBEDDING_DIMS))
    emb_table = jax.random.uniform(
        k_emb, (VOCAB_SIZE + 1, EMBEDDING_DIMS),
        minval=-bound, maxval=bound, dtype=jnp.float32)
    # torch Linear weight has shape (C, E); we keep its transpose (E, C).
    w_t = (jax.random.normal(k_w, (EMBEDDING_DIMS, NUM_CLASSES), jnp.float32)
           / jnp.sqrt(jnp.float32(EMBEDDING_DIMS)))
    bias = jnp.zeros((NUM_CLASSES,), jnp.float32)
    return emb_table, w_t, bias


def reference(ids, emb_table, w_t, bias):
    emb = jnp.take(emb_table, ids, axis=0)                # (B, S, E)
    mean = emb.mean(axis=1)                               # (B, E)
    return (jnp.dot(mean, w_t, precision=lax.Precision.HIGHEST)
            + bias[None, :])                              # (B, C)


if __name__ == "__main__":
    key = jax.random.PRNGKey(0)
    k_params, k_ids, k_ids2 = jax.random.split(key, 3)

    emb_table, w_t, bias = init_params(k_params)

    # Small-shape check: batch=2, seq=8 (single grid step, TB == B).
    batch, seq = 2, 8
    ids = jax.random.randint(k_ids, (batch, seq), 0, VOCAB_SIZE + 1,
                             dtype=jnp.int32)
    out = jax.block_until_ready(word_averaging_linear(ids, emb_table, w_t, bias))
    ref = reference(ids, emb_table, w_t, bias)
    assert out.shape == (batch, NUM_CLASSES)
    assert jnp.allclose(out, ref, atol=1e-5, rtol=1e-5), (out, ref)

    # Larger batch: exercises the batch-tiling + padding path (TB=128, grid=2).
    batch2 = 130
    ids2 = jax.random.randint(k_ids2, (batch2, seq), 0, VOCAB_SIZE + 1,
                              dtype=jnp.int32)
    out2 = jax.block_until_ready(word_averaging_linear(ids2, emb_table, w_t, bias))
    ref2 = reference(ids2, emb_table, w_t, bias)
    assert out2.shape == (batch2, NUM_CLASSES)
    assert jnp.allclose(out2, ref2, atol=1e-5, rtol=1e-5)

    print("KERNEL_OK")
</pallas_src>

<mosaic_0001>
module attributes {stable_mosaic.version = 11 : i64} {
  func.func @_word_avg_kernel(%arg0: i32, %arg1: memref<2x8xi32, #tpu.memory_space<smem>>, %arg2: memref<10001x2xf32, #tpu.memory_space<vmem>>, %arg3: memref<1x2xf32, #tpu.memory_space<vmem>>, %arg4: memref<2x2xf32, #tpu.memory_space<vmem>>) attributes {dimension_semantics = [#tpu.dimension_semantics<parallel>], iteration_bounds = array<i64: 1>, scalar_prefetch = 0 : i64, scratch_operands = 0 : i64, tpu.core_type = #tpu.core_type<tc>, window_params = [{transform_indices = @transform_0, window_bounds = array<i64: 2, 8>}, {pipeline_mode = #tpu.pipeline_mode<synchronous>, transform_indices = @transform_1, window_bounds = array<i64: 10001, 2>}, {pipeline_mode = #tpu.pipeline_mode<synchronous>, transform_indices = @transform_2, window_bounds = array<i64: 1, 2>}, {transform_indices = @transform_3, window_bounds = array<i64: 2, 2>}]} {
    %c0 = arith.constant 0 : index
    %c0_0 = arith.constant 0 : index
    %0 = vector.load %arg3[%c0, %c0_0] : memref<1x2xf32, #tpu.memory_space<vmem>>, vector<1x2xf32>
    %cst = arith.constant 1.250000e-01 : f32
    %c0_i32 = arith.constant 0 : i32
    %1 = arith.index_cast %c0_i32 : i32 to index
    %c0_1 = arith.constant 0 : index
    %2 = memref.load %arg1[%1, %c0_1] : memref<2x8xi32, #tpu.memory_space<smem>>
    %3 = arith.index_cast %2 : i32 to index
    %c0_2 = arith.constant 0 : index
    %4 = vector.load %arg2[%3, %c0_2] : memref<10001x2xf32, #tpu.memory_space<vmem>>, vector<1x2xf32>
    %5 = arith.index_cast %c0_i32 : i32 to index
    %c1 = arith.constant 1 : index
    %6 = memref.load %arg1[%5, %c1] : memref<2x8xi32, #tpu.memory_space<smem>>
    %7 = arith.index_cast %6 : i32 to index
    %c0_3 = arith.constant 0 : index
    %8 = vector.load %arg2[%7, %c0_3] : memref<10001x2xf32, #tpu.memory_space<vmem>>, vector<1x2xf32>
    %9 = arith.index_cast %c0_i32 : i32 to index
    %c2 = arith.constant 2 : index
    %10 = memref.load %arg1[%9, %c2] : memref<2x8xi32, #tpu.memory_space<smem>>
    %11 = arith.index_cast %10 : i32 to index
    %c0_4 = arith.constant 0 : index
    %12 = vector.load %arg2[%11, %c0_4] : memref<10001x2xf32, #tpu.memory_space<vmem>>, vector<1x2xf32>
    %13 = arith.index_cast %c0_i32 : i32 to index
    %c3 = arith.constant 3 : index
    %14 = memref.load %arg1[%13, %c3] : memref<2x8xi32, #tpu.memory_space<smem>>
    %15 = arith.index_cast %14 : i32 to index
    %c0_5 = arith.constant 0 : index
    %16 = vector.load %arg2[%15, %c0_5] : memref<10001x2xf32, #tpu.memory_space<vmem>>, vector<1x2xf32>
    %17 = arith.index_cast %c0_i32 : i32 to index
    %c4 = arith.constant 4 : index
    %18 = memref.load %arg1[%17, %c4] : memref<2x8xi32, #tpu.memory_space<smem>>
    %19 = arith.index_cast %18 : i32 to index
    %c0_6 = arith.constant 0 : index
    %20 = vector.load %arg2[%19, %c0_6] : memref<10001x2xf32, #tpu.memory_space<vmem>>, vector<1x2xf32>
    %21 = arith.index_cast %c0_i32 : i32 to index
    %c5 = arith.constant 5 : index
    %22 = memref.load %arg1[%21, %c5] : memref<2x8xi32, #tpu.memory_space<smem>>
    %23 = arith.index_cast %22 : i32 to index
    %c0_7 = arith.constant 0 : index
    %24 = vector.load %arg2[%23, %c0_7] : memref<10001x2xf32, #tpu.memory_space<vmem>>, vector<1x2xf32>
    %25 = arith.index_cast %c0_i32 : i32 to index
    %c6 = arith.constant 6 : index
    %26 = memref.load %arg1[%25, %c6] : memref<2x8xi32, #tpu.memory_space<smem>>
    %27 = arith.index_cast %26 : i32 to index
    %c0_8 = arith.constant 0 : index
    %28 = vector.load %arg2[%27, %c0_8] : memref<10001x2xf32, #tpu.memory_space<vmem>>, vector<1x2xf32>
    %29 = arith.index_cast %c0_i32 : i32 to index
    %c7 = arith.constant 7 : index
    %30 = memref.load %arg1[%29, %c7] : memref<2x8xi32, #tpu.memory_space<smem>>
    %31 = arith.index_cast %30 : i32 to index
    %c0_9 = arith.constant 0 : index
    %32 = vector.load %arg2[%31, %c0_9] : memref<10001x2xf32, #tpu.memory_space<vmem>>, vector<1x2xf32>
    %33 = arith.addf %4, %8 : vector<1x2xf32>
    %34 = arith.addf %12, %16 : vector<1x2xf32>
    %35 = arith.addf %20, %24 : vector<1x2xf32>
    %36 = arith.addf %28, %32 : vector<1x2xf32>
    %37 = arith.addf %33, %34 : vector<1x2xf32>
    %38 = arith.addf %35, %36 : vector<1x2xf32>
    %39 = arith.addf %37, %38 : vector<1x2xf32>
    %40 = vector.broadcast %cst : f32 to vector<1x2xf32>
    %41 = arith.mulf %39, %40 : vector<1x2xf32>
    %42 = arith.addf %41, %0 : vector<1x2xf32>
    %43 = arith.index_cast %c0_i32 : i32 to index
    %c0_10 = arith.constant 0 : index
    %44 = vector.load %arg4[%43, %c0_10] : memref<2x2xf32, #tpu.memory_space<vmem>>, vector<1x2xf32>
    tpu.vector_store %arg4[%43, %c0_10], %42 {strides = array<i32>} : memref<2x2xf32, #tpu.memory_space<vmem>>, vector<1x2xf32>,
    %c1_i32 = arith.constant 1 : i32
    %45 = arith.index_cast %c1_i32 : i32 to index
    %c0_11 = arith.constant 0 : index
    %46 = memref.load %arg1[%45, %c0_11] : memref<2x8xi32, #tpu.memory_space<smem>>
    %47 = arith.index_cast %46 : i32 to index
    %c0_12 = arith.constant 0 : index
    %48 = vector.load %arg2[%47, %c0_12] : memref<10001x2xf32, #tpu.memory_space<vmem>>, vector<1x2xf32>
    %49 = arith.index_cast %c1_i32 : i32 to index
    %c1_13 = arith.constant 1 : index
    %50 = memref.load %arg1[%49, %c1_13] : memref<2x8xi32, #tpu.memory_space<smem>>
    %51 = arith.index_cast %50 : i32 to index
    %c0_14 = arith.constant 0 : index
    %52 = vector.load %arg2[%51, %c0_14] : memref<10001x2xf32, #tpu.memory_space<vmem>>, vector<1x2xf32>
    %53 = arith.index_cast %c1_i32 : i32 to index
    %c2_15 = arith.constant 2 : index
    %54 = memref.load %arg1[%53, %c2_15] : memref<2x8xi32, #tpu.memory_space<smem>>
    %55 = arith.index_cast %54 : i32 to index
    %c0_16 = arith.constant 0 : index
    %56 = vector.load %arg2[%55, %c0_16] : memref<10001x2xf32, #tpu.memory_space<vmem>>, vector<1x2xf32>
    %57 = arith.index_cast %c1_i32 : i32 to index
    %c3_17 = arith.constant 3 : index
    %58 = memref.load %arg1[%57, %c3_17] : memref<2x8xi32, #tpu.memory_space<smem>>
    %59 = arith.index_cast %58 : i32 to index
    %c0_18 = arith.constant 0 : index
    %60 = vector.load %arg2[%59, %c0_18] : memref<10001x2xf32, #tpu.memory_space<vmem>>, vector<1x2xf32>
    %61 = arith.index_cast %c1_i32 : i32 to index
    %c4_19 = arith.constant 4 : index
    %62 = memref.load %arg1[%61, %c4_19] : memref<2x8xi32, #tpu.memory_space<smem>>
    %63 = arith.index_cast %62 : i32 to index
    %c0_20 = arith.constant 0 : index
    %64 = vector.load %arg2[%63, %c0_20] : memref<10001x2xf32, #tpu.memory_space<vmem>>, vector<1x2xf32>
    %65 = arith.index_cast %c1_i32 : i32 to index
    %c5_21 = arith.constant 5 : index
    %66 = memref.load %arg1[%65, %c5_21] : memref<2x8xi32, #tpu.memory_space<smem>>
    %67 = arith.index_cast %66 : i32 to index
    %c0_22 = arith.constant 0 : index
    %68 = vector.load %arg2[%67, %c0_22] : memref<10001x2xf32, #tpu.memory_space<vmem>>, vector<1x2xf32>
    %69 = arith.index_cast %c1_i32 : i32 to index
    %c6_23 = arith.constant 6 : index
    %70 = memref.load %arg1[%69, %c6_23] : memref<2x8xi32, #tpu.memory_space<smem>>
    %71 = arith.index_cast %70 : i32 to index
    %c0_24 = arith.constant 0 : index
    %72 = vector.load %arg2[%71, %c0_24] : memref<10001x2xf32, #tpu.memory_space<vmem>>, vector<1x2xf32>
    %73 = arith.index_cast %c1_i32 : i32 to index
    %c7_25 = arith.constant 7 : index
    %74 = memref.load %arg1[%73, %c7_25] : memref<2x8xi32, #tpu.memory_space<smem>>
    %75 = arith.index_cast %74 : i32 to index
    %c0_26 = arith.constant 0 : index
    %76 = vector.load %arg2[%75, %c0_26] : memref<10001x2xf32, #tpu.memory_space<vmem>>, vector<1x2xf32>
    %77 = arith.addf %48, %52 : vector<1x2xf32>
    %78 = arith.addf %56, %60 : vector<1x2xf32>
    %79 = arith.addf %64, %68 : vector<1x2xf32>
    %80 = arith.addf %72, %76 : vector<1x2xf32>
    %81 = arith.addf %77, %78 : vector<1x2xf32>
    %82 = arith.addf %79, %80 : vector<1x2xf32>
    %83 = arith.addf %81, %82 : vector<1x2xf32>
    %84 = vector.broadcast %cst : f32 to vector<1x2xf32>
    %85 = arith.mulf %83, %84 : vector<1x2xf32>
    %86 = arith.addf %85, %0 : vector<1x2xf32>
    %87 = arith.index_cast %c1_i32 : i32 to index
    %c0_27 = arith.constant 0 : index
    %88 = vector.load %arg4[%87, %c0_27] : memref<2x2xf32, #tpu.memory_space<vmem>>, vector<1x2xf32>
    tpu.vector_store %arg4[%87, %c0_27], %86 {strides = array<i32>} : memref<2x2xf32, #tpu.memory_space<vmem>>, vector<1x2xf32>,
    %c2_i32 = arith.constant 2 : i32
    return
  }
  func.func @transform_0(%arg0: i32) -> (i32, i32) {
    %c0_i32 = arith.constant 0 : i32
    %c0_i32_0 = arith.constant 0 : i32
    return %arg0, %c0_i32 : i32, i32
  }
  func.func @transform_1(%arg0: i32) -> (i32, i32) {
    %c0_i32 = arith.constant 0 : i32
    %c0_i32_0 = arith.constant 0 : i32
    %c0_i32_1 = arith.constant 0 : i32
    return %c0_i32, %c0_i32_0 : i32, i32
  }
  func.func @transform_2(%arg0: i32) -> (i32, i32) {
    %c0_i32 = arith.constant 0 : i32
    %c0_i32_0 = arith.constant 0 : i32
    %c0_i32_1 = arith.constant 0 : i32
    return %c0_i32, %c0_i32_0 : i32, i32
  }
  func.func @transform_3(%arg0: i32) -> (i32, i32) {
    %c0_i32 = arith.constant 0 : i32
    %c0_i32_0 = arith.constant 0 : i32
    return %arg0, %c0_i32 : i32, i32
  }
}

</mosaic_0001>

<llo_original>
// kernel: word_averaging_linear.1
$region0: #{word_averaging_linear.1}
  #allocation0 [shape = 'u32[]', space=smem, size = 0x4, offset = 0x4, fixed_abs, tag = 'smem constant byte address 0x4 - core index']
  #allocation1 [shape = 'u32[72,128]{1,0:T(1,128)}', space=vmem, size = 0x9000, scoped, tag = 'internal scratch']
  %s0 = inlined_call_operand.vmem [shape: s32[2,8], index: 0, kind: input, shape index: {}]
  %s1 = inlined_call_operand.vmem [shape: f32[10001,2], index: 1, kind: input, shape index: {}]
  %s2 = inlined_call_operand.vmem [shape: f32[1,2], index: 2, kind: input, shape index: {}]
  %s3 = inlined_call_operand.hbm [shape: f32[2,2], index: 3, kind: output, shape index: {}]
  %s4 = sld [smem:[#allocation0]]
  $region26: #{word_averaging_linear.1} parent=0
    _
  %s6 = ssub.s32 1, %s4
  %s7 = scalar_select 0, %s6, %s4
  $region1: #{word_averaging_linear.1} parent=0
    #allocation2 [shape = 'u8[1024]{0}', space=smem, size = 0x400, scoped, tag = 'input window, operand 0, single buffered']
    #allocation3 [shape = 's32[1]{0}', space=sflag, size = 0x4, scoped, tag = 'scoped memory for word_averaging_linear.1']
    #allocation4 [shape = 's32[1]{0}', space=sflag, size = 0x4, scoped, tag = 'scoped memory for word_averaging_linear.1']
    #allocation5 [shape = 'u8[1024]{0}', space=vmem, size = 0x400, scoped, tag = 'output window, operand 0, single buffered']
    %8 = vsyncpa [#allocation4], 0
    %9 = vsyncpa [#allocation3], 0
    // Predicated region
    $region2: #{word_averaging_linear.1} parent=1 // pred_check
      _
    $region3: #{word_averaging_linear.1} parent=1 // pred_check_branch
      %11 = sbr.rel (0) target = $region5
    $region4: #{word_averaging_linear.1} parent=1 // pred_region
      %13 = vsyncadd [#allocation4], 0
      %s15 = sshll.u32 %s0, 4
      %s16 = int_to_ptr.vmem [resolvable:$true] %s15
      %18 = dma.vmem_to_smem %s16, 32, [#allocation2], [#allocation4]
    $region5: #{word_averaging_linear.1} parent=1 // pred_fallthru
      _
    // Predicated region
    $region6: #{word_averaging_linear.1} parent=1 // pred_check
      _
    $region7: #{word_averaging_linear.1} parent=1 // pred_check_branch
      %20 = sbr.rel (0) target = $region9
    $region8: #{word_averaging_linear.1} parent=1 // pred_region
      _
    $region9: #{word_averaging_linear.1} parent=1 // pred_fallthru
      _
    // Predicated region
    $region10: #{word_averaging_linear.1} parent=1 // pred_check
      _
    $region11: #{word_averaging_linear.1} parent=1 // pred_check_branch
      %22 = sbr.rel (0) target = $region13
    $region12: #{word_averaging_linear.1} parent=1 // pred_region
      _
    $region13: #{word_averaging_linear.1} parent=1 // pred_fallthru
      _
    // Predicated region
    $region14: #{word_averaging_linear.1} parent=1 // pred_check
      _
    $region15: #{word_averaging_linear.1} parent=1 // pred_check_branch
      %24 = sbr.rel (0) target = $region17
    $region16: #{word_averaging_linear.1} parent=1 // pred_region
      %26 = dma.done [#allocation4], 32
    $region17: #{word_averaging_linear.1} parent=1 // pred_fallthru
      _
    %27 = sfence
    %v28 = vld [vmem:[%s2] sm:$0x1]
    %s29 = sld [smem:[#allocation2]]
    %s30 = scalar_lea.vmem %s1, %s29
    %v31 = vld [vmem:[%s30] sm:$0x1]
    %s32 = sld [smem:[#allocation2 + $0x1]]
    %s33 = scalar_lea.vmem %s1, %s32
    %v34 = vld [vmem:[%s33] sm:$0x1]
    %s35 = sld [smem:[#allocation2 + $0x2]]
    %s36 = scalar_lea.vmem %s1, %s35
    %v37 = vld [vmem:[%s36] sm:$0x1]
    %s38 = sld [smem:[#allocation2 + $0x3]]
    %s39 = scalar_lea.vmem %s1, %s38
    %v40 = vld [vmem:[%s39] sm:$0x1]
    %s41 = sld [smem:[#allocation2 + $0x4]]
    %s42 = scalar_lea.vmem %s1, %s41
    %v43 = vld [vmem:[%s42] sm:$0x1]
    %s44 = sld [smem:[#allocation2 + $0x5]]
    %s45 = scalar_lea.vmem %s1, %s44
    %v46 = vld [vmem:[%s45] sm:$0x1]
    %s47 = sld [smem:[#allocation2 + $0x6]]
    %s48 = scalar_lea.vmem %s1, %s47
    %v49 = vld [vmem:[%s48] sm:$0x1]
    %s50 = sld [smem:[#allocation2 + $0x7]]
    %s51 = scalar_lea.vmem %s1, %s50
    %v52 = vld [vmem:[%s51] sm:$0x1]
    %v53 = vadd.f32 %v31, %v34
    %v54 = vadd.f32 %v37, %v40
    %v55 = vadd.f32 %v43, %v46
    %v56 = vadd.f32 %v49, %v52
    %v57 = vadd.f32 %v53, %v54
    %v58 = vadd.f32 %v55, %v56
    %v59 = vadd.f32 %v57, %v58
    %v60 = vmul.f32 %v59, 0.125
    %v61 = vadd.f32 %v60, %v28
    %vm62 = vcmask 8192
    %63 = vst.msk [vmem:[#allocation5] sm:$0x1] %vm62, %v61
    %s64 = sld [smem:[#allocation2 + $0x80]]
    %s65 = scalar_lea.vmem %s1, %s64
    %v66 = vld [vmem:[%s65] sm:$0x1]
    %s67 = sld [smem:[#allocation2 + $0x81]]
    %s68 = scalar_lea.vmem %s1, %s67
    %v69 = vld [vmem:[%s68] sm:$0x1]
    %s70 = sld [smem:[#allocation2 + $0x82]]
    %s71 = scalar_lea.vmem %s1, %s70
    %v72 = vld [vmem:[%s71] sm:$0x1]
    %s73 = sld [smem:[#allocation2 + $0x83]]
    %s74 = scalar_lea.vmem %s1, %s73
    %v75 = vld [vmem:[%s74] sm:$0x1]
    %s76 = sld [smem:[#allocation2 + $0x84]]
    %s77 = scalar_lea.vmem %s1, %s76
    %v78 = vld [vmem:[%s77] sm:$0x1]
    %s79 = sld [smem:[#allocation2 + $0x85]]
    %s80 = scalar_lea.vmem %s1, %s79
    %v81 = vld [vmem:[%s80] sm:$0x1]
    %s82 = sld [smem:[#allocation2 + $0x86]]
    %s83 = scalar_lea.vmem %s1, %s82
    %v84 = vld [vmem:[%s83] sm:$0x1]
    %s85 = sld [smem:[#allocation2 + $0x87]]
    %s86 = scalar_lea.vmem %s1, %s85
    %v87 = vld [vmem:[%s86] sm:$0x1]
    %v88 = vadd.f32 %v66, %v69
    %v89 = vadd.f32 %v72, %v75
    %v90 = vadd.f32 %v78, %v81
    %v91 = vadd.f32 %v84, %v87
    %v92 = vadd.f32 %v88, %v89
    %v93 = vadd.f32 %v90, %v91
    %v94 = vadd.f32 %v92, %v93
    %v95 = vmul.f32 %v94, 0.125
    %v96 = vadd.f32 %v95, %v28
    %97 = vst.msk [vmem:[#allocation5 + $0x1] sm:$0x1] %vm62, %v96
    // Predicated region
    $region18: #{word_averaging_linear.1} parent=1 // pred_check
      _
    $region19: #{word_averaging_linear.1} parent=1 // pred_check_branch
      %99 = sbr.rel (0) target = $region21
    $region20: #{word_averaging_linear.1} parent=1 // pred_region
      %101 = vsyncadd [#allocation3], 0
      %s103 = sshll.u32 [#allocation5], 4
      %s104 = int_to_ptr.vmem [resolvable:$true] %s103
      %s105 = sshll.u32 %s3, 4
      %s106 = int_to_ptr.hbm [resolvable:$true] %s105
      %108 = dma.vmem_to_hbm [thread:$0]  %s104, 32, %s106, [#allocation3]
    $region21: #{word_averaging_linear.1} parent=1 // pred_fallthru
      _
    // Predicated region
    $region22: #{word_averaging_linear.1} parent=1 // pred_check
      _
    $region23: #{word_averaging_linear.1} parent=1 // pred_check_branch
      %110 = sbr.rel (0) target = $region25
    $region24: #{word_averaging_linear.1} parent=1 // pred_region
      %112 = dma.done [#allocation3], 32
    $region25: #{word_averaging_linear.1} parent=1 // pred_fallthru
      _
    %113 = vsyncpa [#allocation3], 1
    %114 = vsyncpa [#allocation4], 1

</llo_original>
